<compile_context>
chip_gen: v6e
topology: v6e:2x2x1
jax: 0.10.0
libtpu: 0.0.40
codegen_flags: <defaults>
</compile_context>

<pallas_src>
import functools
import math

import jax
import jax.numpy as jnp
from jax.experimental import pallas as pl
from jax.experimental.pallas import tpu as pltpu


def _round_up(x, m):
    return ((x + m - 1) // m) * m


# ----------------------------------------------------------------------------
# Pallas kernel: fused 2 x LSTMCell + 2 linear heads, batch = 1.
# ----------------------------------------------------------------------------
def lstm_tele_kernel(gu_ref, gv_ref, hid_ref, cel_ref, wslab_ref,
                     h_ref, c_ref, g_ref, step_ref, *,
                     Du, Dv, H, G, Lin, Lhead, RB, R2, RL, RBL):
    H4 = 4 * H

    xu = gu_ref[...]                       # (1, Du)  flattened dL_dU
    xv = gv_ref[...]                       # (1, Dv)  flattened dL_dV
    h0_prev = hid_ref[0:1, :]              # (1, H)
    h1_prev = hid_ref[1:2, :]              # (1, H)
    c0_prev = cel_ref[0:1, :]              # (1, H)
    c1_prev = cel_ref[1:2, :]              # (1, H)

    # Assemble the fused LHS row [x | h0_prev | h1_prev | 0] in-register
    # (no wrapper-side state slab / extra HBM round-trip).
    x_h = jnp.concatenate([xu, xv, h0_prev, h1_prev], axis=1)
    pad = Lin - (Du + Dv + 2 * H)
    if pad:
        x_h = jnp.pad(x_h, ((0, 0), (0, pad)))          # (1, Lin)

    # One wide MXU pass over the fused weight block: big = [z1 | z2_hh]
    #   z1    = x @ wih1 + h0_prev @ whh1 + (b_ih1 + b_hh1)
    #   z2_hh = h1_prev @ whh2            + (b_ih2 + b_hh2)
    big = (jnp.dot(x_h, wslab_ref[0:Lin, :],
                   preferred_element_type=jnp.float32)
           + wslab_ref[RB:RB + 1, :])                    # (1, 8H)

    def gates(z, c_prev):
        # PyTorch LSTMCell gate order: i, f, g, o.
        # Single full-vector sigmoid + tanh (one EUP pass each), slice after.
        s = jax.nn.sigmoid(z)
        t = jnp.tanh(z)
        i = s[:, 0:H]
        f = s[:, H:2 * H]
        g = t[:, 2 * H:3 * H]
        o = s[:, 3 * H:4 * H]
        c_new = f * c_prev + i * g
        h_new = o * jnp.tanh(c_new)
        return h_new, c_new

    # cell 1
    h0, c0 = gates(big[:, 0:H4], c0_prev)

    # cell 2: only the input-recurrent matmul remains on the serial chain.
    z2 = big[:, H4:2 * H4] + jnp.dot(h0, wslab_ref[R2:R2 + H, 0:H4],
                                     preferred_element_type=jnp.float32)
    h1, c1 = gates(z2, c1_prev)

    # fused output heads: [g_flat | step | pad]
    head = (jnp.dot(h1, wslab_ref[RL:RL + H, 0:Lhead],
                    preferred_element_type=jnp.float32)
            + wslab_ref[RBL:RBL + 1, 0:Lhead])           # (1, Lhead)

    # Final-shaped outputs via direct slice stores (no concat epilogue).
    h_ref[0:1, :] = h0
    h_ref[1:2, :] = h1
    c_ref[0:1, :] = c0
    c_ref[1:2, :] = c1
    g_ref[...] = head[:, 0:G]
    step_ref[...] = jnp.clip(head[:, G:G + 1], 1e-07, 0.005)


# ----------------------------------------------------------------------------
# Parameter construction (deterministic, PyTorch-style uniform init)
# ----------------------------------------------------------------------------
def init_params(key, input_dim, hidden_dim, out_dim):
    def uniform(k, shape, bound):
        return jax.random.uniform(k, shape, jnp.float32, -bound, bound)

    ks = jax.random.split(key, 14)
    kb_lstm = 1.0 / math.sqrt(hidden_dim)
    kb_lin = 1.0 / math.sqrt(hidden_dim)

    p = {}
    p["w_ih1"] = uniform(ks[0], (4 * hidden_dim, input_dim), kb_lstm)
    p["w_hh1"] = uniform(ks[1], (4 * hidden_dim, hidden_dim), kb_lstm)
    p["b_ih1"] = uniform(ks[2], (4 * hidden_dim,), kb_lstm)
    p["b_hh1"] = uniform(ks[3], (4 * hidden_dim,), kb_lstm)
    p["w_ih2"] = uniform(ks[4], (4 * hidden_dim, hidden_dim), kb_lstm)
    p["w_hh2"] = uniform(ks[5], (4 * hidden_dim, hidden_dim), kb_lstm)
    p["b_ih2"] = uniform(ks[6], (4 * hidden_dim,), kb_lstm)
    p["b_hh2"] = uniform(ks[7], (4 * hidden_dim,), kb_lstm)
    p["w_l1"] = uniform(ks[8], (out_dim * out_dim, hidden_dim), kb_lin)
    p["b_l1"] = uniform(ks[9], (out_dim * out_dim,), kb_lin)
    p["w_l2"] = uniform(ks[10], (1, hidden_dim), kb_lin)
    p["b_l2"] = uniform(ks[11], (1,), kb_lin)
    return p


# ----------------------------------------------------------------------------
# One-time packing of ALL parameters into a single lane-dense weight slab.
#
# Slab layout (rows, all segments start at 8-aligned offsets; cols = 8H):
#   rows 0      .. Lin-1 : W_big = [[wih1|0],[whh1|0],[0|whh2],[0|0]]
#   row  RB              : [b_ih1+b_hh1 | b_ih2+b_hh2]
#   rows R2     .. R2+H-1: wih2.T              (cols 0..4H-1)
#   rows RL     .. RL+H-1: [wl1.T | wl2.T | 0] (cols 0..Lhead-1)
#   row  RBL             : [bl1   | bl2   | 0] (cols 0..Lhead-1)
# ----------------------------------------------------------------------------
def prepare_params(params, du, dv, hidden_dim, out_dim):
    D, H, G = du + dv, hidden_dim, out_dim * out_dim
    Lin = _round_up(D + 2 * H, 128)
    Lhead = _round_up(G + 1, 128)
    C = max(8 * H, Lhead, 128)

    RB = Lin
    R2 = _round_up(RB + 1, 8)
    RL = _round_up(R2 + H, 8)
    RBL = _round_up(RL + H, 8)
    Rtot = _round_up(RBL + 1, 8)

    wslab = jnp.zeros((Rtot, C), jnp.float32)
    # W_big
    wslab = wslab.at[0:D, 0:4 * H].set(params["w_ih1"].T)
    wslab = wslab.at[D:D + H, 0:4 * H].set(params["w_hh1"].T)
    wslab = wslab.at[D + H:D + 2 * H, 4 * H:8 * H].set(params["w_hh2"].T)
    # fused biases
    wslab = wslab.at[RB, 0:4 * H].set(params["b_ih1"] + params["b_hh1"])
    wslab = wslab.at[RB, 4 * H:8 * H].set(params["b_ih2"] + params["b_hh2"])
    # wih2.T (cell-2 input-recurrent weights)
    wslab = wslab.at[R2:R2 + H, 0:4 * H].set(params["w_ih2"].T)
    # fused output heads
    wslab = wslab.at[RL:RL + H, 0:G].set(params["w_l1"].T)
    wslab = wslab.at[RL:RL + H, G:G + 1].set(params["w_l2"].T)
    wslab = wslab.at[RBL, 0:G].set(params["b_l1"])
    wslab = wslab.at[RBL, G:G + 1].set(params["b_l2"])

    dims = dict(Du=du, Dv=dv, H=H, G=G, Lin=Lin, Lhead=Lhead,
                RB=RB, R2=R2, RL=RL, RBL=RBL)
    return wslab, dims


# ----------------------------------------------------------------------------
# Jitted forward: free reshapes -> single pallas_call -> free reshapes.
# ----------------------------------------------------------------------------
def make_forward(wslab, dims, out_dim):
    H, G = dims["H"], dims["G"]

    kernel = functools.partial(lstm_tele_kernel, **dims)
    vmem = pl.BlockSpec(memory_space=pltpu.MemorySpace.VMEM)
    call = pl.pallas_call(
        kernel,
        out_shape=(jax.ShapeDtypeStruct((2, H), jnp.float32),   # [h0; h1]
                   jax.ShapeDtypeStruct((2, H), jnp.float32),   # [c0; c1]
                   jax.ShapeDtypeStruct((1, G), jnp.float32),   # g (flat)
                   jax.ShapeDtypeStruct((1, 1), jnp.float32)),  # step size
        in_specs=[vmem] * 5,
        out_specs=(vmem, vmem, vmem, vmem),
    )

    @jax.jit
    def forward(dL_dU, dL_dV, hidden, cell):
        # Only free (contiguous) reshapes on the host side; all packing and
        # output assembly happens inside the kernel.
        h_out, c_out, g_flat, step = call(
            dL_dU.reshape(1, -1), dL_dV.reshape(1, -1),
            hidden.reshape(2, H), cell.reshape(2, H), wslab)
        g = g_flat.reshape(out_dim, out_dim)
        return (g, step,
                h_out.reshape(2, 1, H),
                c_out.reshape(2, 1, H))

    return forward


# ----------------------------------------------------------------------------
# Pure-JAX reference (mirrors the PyTorch forward) for a correctness check.
# ----------------------------------------------------------------------------
def reference_forward(dL_dU, dL_dV, hidden, cell, params, out_dim):
    H = hidden.shape[-1]

    def lstm_cell(x, h, c, w_ih, w_hh, b_ih, b_hh):
        z = x @ w_ih.T + b_ih + h @ w_hh.T + b_hh
        i = jax.nn.sigmoid(z[:, 0 * H:1 * H])
        f = jax.nn.sigmoid(z[:, 1 * H:2 * H])
        g = jnp.tanh(z[:, 2 * H:3 * H])
        o = jax.nn.sigmoid(z[:, 3 * H:4 * H])
        c_new = f * c + i * g
        return o * jnp.tanh(c_new), c_new

    x = jnp.concatenate([dL_dU.reshape(-1), dL_dV.reshape(-1)], 0)[None, :]
    h0, c0 = lstm_cell(x, hidden[0], cell[0],
                       params["w_ih1"], params["w_hh1"],
                       params["b_ih1"], params["b_hh1"])
    h1, c1 = lstm_cell(h0, hidden[1], cell[1],
                       params["w_ih2"], params["w_hh2"],
                       params["b_ih2"], params["b_hh2"])
    g = (h1 @ params["w_l1"].T + params["b_l1"]).reshape(out_dim, out_dim)
    step = jnp.clip(h1 @ params["w_l2"].T + params["b_l2"], 1e-07, 0.005)
    return g, step, jnp.stack((h0, h1)), jnp.stack((c0, c1))


if __name__ == "__main__":
    # Small shapes: dL_dU, dL_dV are (4, 4) -> input_dim = 32, hidden = 32,
    # out_dim = 4.
    U_shape = (4, 4)
    V_shape = (4, 4)
    du = U_shape[0] * U_shape[1]
    dv = V_shape[0] * V_shape[1]
    input_dim = du + dv                     # 32
    hidden_dim = 32
    out_dim = 4

    key = jax.random.PRNGKey(0)
    k_u, k_v, k_h, k_c, k_p = jax.random.split(key, 5)

    dL_dU = jax.random.normal(k_u, U_shape, jnp.float32)
    dL_dV = jax.random.normal(k_v, V_shape, jnp.float32)
    hidden = jax.random.normal(k_h, (2, 1, hidden_dim), jnp.float32)
    cell = jax.random.normal(k_c, (2, 1, hidden_dim), jnp.float32)
    params = init_params(k_p, input_dim, hidden_dim, out_dim)

    # One-time parameter packing into a single VMEM-resident weight slab.
    wslab, dims = prepare_params(params, du, dv, hidden_dim, out_dim)
    forward = make_forward(wslab, dims, out_dim)

    g, step, h_out, c_out = forward(dL_dU, dL_dV, hidden, cell)
    jax.block_until_ready((g, step, h_out, c_out))

    # Correctness check against the pure-JAX reference.
    g_r, step_r, h_r, c_r = reference_forward(
        dL_dU, dL_dV, hidden, cell, params, out_dim)
    assert jnp.allclose(g, g_r, rtol=1e-4, atol=1e-5)
    assert jnp.allclose(step, step_r, rtol=1e-4, atol=1e-6)
    assert jnp.allclose(h_out, h_r, rtol=1e-4, atol=1e-5)
    assert jnp.allclose(c_out, c_r, rtol=1e-4, atol=1e-5)

    print("KERNEL_OK")
</pallas_src>

<mosaic_0001>
module attributes {stable_mosaic.version = 11 : i64} {
  func.func @lstm_tele_kernel(%arg0: memref<1x16xf32, #tpu.memory_space<vmem>>, %arg1: memref<1x16xf32, #tpu.memory_space<vmem>>, %arg2: memref<2x32xf32, #tpu.memory_space<vmem>>, %arg3: memref<2x32xf32, #tpu.memory_space<vmem>>, %arg4: memref<208x256xf32, #tpu.memory_space<vmem>>, %arg5: memref<2x32xf32, #tpu.memory_space<vmem>>, %arg6: memref<2x32xf32, #tpu.memory_space<vmem>>, %arg7: memref<1x16xf32, #tpu.memory_space<vmem>>, %arg8: memref<1x1xf32, #tpu.memory_space<vmem>>) attributes {dimension_semantics = [], scalar_prefetch = 0 : i64, scratch_operands = 0 : i64, tpu.core_type = #tpu.core_type<tc>} {
    %c0 = arith.constant 0 : index
    %c0_0 = arith.constant 0 : index
    %0 = vector.load %arg0[%c0, %c0_0] : memref<1x16xf32, #tpu.memory_space<vmem>>, vector<1x16xf32>
    %c0_1 = arith.constant 0 : index
    %c0_2 = arith.constant 0 : index
    %1 = vector.load %arg1[%c0_1, %c0_2] : memref<1x16xf32, #tpu.memory_space<vmem>>, vector<1x16xf32>
    %c0_3 = arith.constant 0 : index
    %c0_4 = arith.constant 0 : index
    %2 = vector.load %arg2[%c0_3, %c0_4] : memref<2x32xf32, #tpu.memory_space<vmem>>, vector<1x32xf32>
    %c1 = arith.constant 1 : index
    %c0_5 = arith.constant 0 : index
    %3 = vector.load %arg2[%c1, %c0_5] : memref<2x32xf32, #tpu.memory_space<vmem>>, vector<1x32xf32>
    %c0_6 = arith.constant 0 : index
    %c0_7 = arith.constant 0 : index
    %4 = vector.load %arg3[%c0_6, %c0_7] : memref<2x32xf32, #tpu.memory_space<vmem>>, vector<1x32xf32>
    %c1_8 = arith.constant 1 : index
    %c0_9 = arith.constant 0 : index
    %5 = vector.load %arg3[%c1_8, %c0_9] : memref<2x32xf32, #tpu.memory_space<vmem>>, vector<1x32xf32>
    %6 = tpu.concatenate %0, %1, %2, %3 in 1 : vector<1x16xf32>, vector<1x16xf32>, vector<1x32xf32>, vector<1x32xf32> -> vector<1x96xf32>
    %c0_i32 = arith.constant 0 : i32
    %7 = arith.sitofp %c0_i32 : i32 to f32
    %8 = vector.broadcast %7 : f32 to vector<1x32xf32>
    %9 = tpu.concatenate %6, %8 in 1 : vector<1x96xf32>, vector<1x32xf32> -> vector<1x128xf32>
    %c0_10 = arith.constant 0 : index
    %c0_11 = arith.constant 0 : index
    %10 = vector.load %arg4[%c0_10, %c0_11] : memref<208x256xf32, #tpu.memory_space<vmem>>, vector<128x256xf32>
    %cst = arith.constant dense<0.000000e+00> : vector<1x256xf32>
    %11 = tpu.matmul %9, %10, %cst {dimension_numbers = #tpu.dot_dimension_numbers<[1], [0], [0], [1], [0, 0, 1, 1], [], []>} : vector<1x128xf32>, vector<128x256xf32>, vector<1x256xf32> -> vector<1x256xf32>
    %c128 = arith.constant 128 : index
    %c0_12 = arith.constant 0 : index
    %12 = vector.load %arg4[%c128, %c0_12] : memref<208x256xf32, #tpu.memory_space<vmem>>, vector<1x256xf32>
    %13 = arith.addf %11, %12 : vector<1x256xf32>
    %14 = vector.extract_strided_slice %13 {offsets = [0, 0], sizes = [1, 128], strides = [1, 1]} : vector<1x256xf32> to vector<1x128xf32>
    %15 = arith.negf %14 : vector<1x128xf32>
    %16 = math.exp %15 : vector<1x128xf32>
    %cst_13 = arith.constant 1.000000e+00 : f32
    %17 = vector.broadcast %cst_13 : f32 to vector<1x128xf32>
    %18 = arith.addf %17, %16 : vector<1x128xf32>
    %19 = arith.divf %17, %18 : vector<1x128xf32>
    %20 = math.tanh %14 : vector<1x128xf32>
    %21 = vector.extract_strided_slice %19 {offsets = [0, 0], sizes = [1, 32], strides = [1, 1]} : vector<1x128xf32> to vector<1x32xf32>
    %22 = vector.extract_strided_slice %19 {offsets = [0, 32], sizes = [1, 32], strides = [1, 1]} : vector<1x128xf32> to vector<1x32xf32>
    %23 = vector.extract_strided_slice %20 {offsets = [0, 64], sizes = [1, 32], strides = [1, 1]} : vector<1x128xf32> to vector<1x32xf32>
    %24 = vector.extract_strided_slice %19 {offsets = [0, 96], sizes = [1, 32], strides = [1, 1]} : vector<1x128xf32> to vector<1x32xf32>
    %25 = arith.mulf %22, %4 : vector<1x32xf32>
    %26 = arith.mulf %21, %23 : vector<1x32xf32>
    %27 = arith.addf %25, %26 : vector<1x32xf32>
    %28 = math.tanh %27 : vector<1x32xf32>
    %29 = arith.mulf %24, %28 : vector<1x32xf32>
    %30 = vector.extract_strided_slice %13 {offsets = [0, 128], sizes = [1, 128], strides = [1, 1]} : vector<1x256xf32> to vector<1x128xf32>
    %c136 = arith.constant 136 : index
    %c0_14 = arith.constant 0 : index
    %31 = vector.load %arg4[%c136, %c0_14] : memref<208x256xf32, #tpu.memory_space<vmem>>, vector<32x128xf32>
    %cst_15 = arith.constant dense<0.000000e+00> : vector<1x128xf32>
    %32 = tpu.matmul %29, %31, %cst_15 {dimension_numbers = #tpu.dot_dimension_numbers<[1], [0], [0], [1], [0, 0, 1, 1], [], []>} : vector<1x32xf32>, vector<32x128xf32>, vector<1x128xf32> -> vector<1x128xf32>
    %33 = arith.addf %30, %32 : vector<1x128xf32>
    %34 = arith.negf %33 : vector<1x128xf32>
    %35 = math.exp %34 : vector<1x128xf32>
    %cst_16 = arith.constant 1.000000e+00 : f32
    %36 = vector.broadcast %cst_16 : f32 to vector<1x128xf32>
    %37 = arith.addf %36, %35 : vector<1x128xf32>
    %38 = arith.divf %36, %37 : vector<1x128xf32>
    %39 = math.tanh %33 : vector<1x128xf32>
    %40 = vector.extract_strided_slice %38 {offsets = [0, 0], sizes = [1, 32], strides = [1, 1]} : vector<1x128xf32> to vector<1x32xf32>
    %41 = vector.extract_strided_slice %38 {offsets = [0, 32], sizes = [1, 32], strides = [1, 1]} : vector<1x128xf32> to vector<1x32xf32>
    %42 = vector.extract_strided_slice %39 {offsets = [0, 64], sizes = [1, 32], strides = [1, 1]} : vector<1x128xf32> to vector<1x32xf32>
    %43 = vector.extract_strided_slice %38 {offsets = [0, 96], sizes = [1, 32], strides = [1, 1]} : vector<1x128xf32> to vector<1x32xf32>
    %44 = arith.mulf %41, %5 : vector<1x32xf32>
    %45 = arith.mulf %40, %42 : vector<1x32xf32>
    %46 = arith.addf %44, %45 : vector<1x32xf32>
    %47 = math.tanh %46 : vector<1x32xf32>
    %48 = arith.mulf %43, %47 : vector<1x32xf32>
    %c168 = arith.constant 168 : index
    %c0_17 = arith.constant 0 : index
    %49 = vector.load %arg4[%c168, %c0_17] : memref<208x256xf32, #tpu.memory_space<vmem>>, vector<32x128xf32>
    %cst_18 = arith.constant dense<0.000000e+00> : vector<1x128xf32>
    %50 = tpu.matmul %48, %49, %cst_18 {dimension_numbers = #tpu.dot_dimension_numbers<[1], [0], [0], [1], [0, 0, 1, 1], [], []>} : vector<1x32xf32>, vector<32x128xf32>, vector<1x128xf32> -> vector<1x128xf32>
    %c200 = arith.constant 200 : index
    %c0_19 = arith.constant 0 : index
    %51 = vector.load %arg4[%c200, %c0_19] : memref<208x256xf32, #tpu.memory_space<vmem>>, vector<1x128xf32>
    %52 = arith.addf %50, %51 : vector<1x128xf32>
    %c0_20 = arith.constant 0 : index
    %c0_21 = arith.constant 0 : index
    %53 = vector.load %arg5[%c0_20, %c0_21] : memref<2x32xf32, #tpu.memory_space<vmem>>, vector<1x32xf32>
    tpu.vector_store %arg5[%c0_20, %c0_21], %29 {strides = array<i32>} : memref<2x32xf32, #tpu.memory_space<vmem>>, vector<1x32xf32>,
    %c1_22 = arith.constant 1 : index
    %c0_23 = arith.constant 0 : index
    %54 = vector.load %arg5[%c1_22, %c0_23] : memref<2x32xf32, #tpu.memory_space<vmem>>, vector<1x32xf32>
    tpu.vector_store %arg5[%c1_22, %c0_23], %48 {strides = array<i32>} : memref<2x32xf32, #tpu.memory_space<vmem>>, vector<1x32xf32>,
    %c0_24 = arith.constant 0 : index
    %c0_25 = arith.constant 0 : index
    %55 = vector.load %arg6[%c0_24, %c0_25] : memref<2x32xf32, #tpu.memory_space<vmem>>, vector<1x32xf32>
    tpu.vector_store %arg6[%c0_24, %c0_25], %27 {strides = array<i32>} : memref<2x32xf32, #tpu.memory_space<vmem>>, vector<1x32xf32>,
    %c1_26 = arith.constant 1 : index
    %c0_27 = arith.constant 0 : index
    %56 = vector.load %arg6[%c1_26, %c0_27] : memref<2x32xf32, #tpu.memory_space<vmem>>, vector<1x32xf32>
    tpu.vector_store %arg6[%c1_26, %c0_27], %46 {strides = array<i32>} : memref<2x32xf32, #tpu.memory_space<vmem>>, vector<1x32xf32>,
    %57 = vector.extract_strided_slice %52 {offsets = [0, 0], sizes = [1, 16], strides = [1, 1]} : vector<1x128xf32> to vector<1x16xf32>
    %c0_28 = arith.constant 0 : index
    %c0_29 = arith.constant 0 : index
    %58 = vector.load %arg7[%c0_28, %c0_29] : memref<1x16xf32, #tpu.memory_space<vmem>>, vector<1x16xf32>
    tpu.vector_store %arg7[%c0_28, %c0_29], %57 {strides = array<i32>} : memref<1x16xf32, #tpu.memory_space<vmem>>, vector<1x16xf32>,
    %59 = vector.extract_strided_slice %52 {offsets = [0, 16], sizes = [1, 1], strides = [1, 1]} : vector<1x128xf32> to vector<1x1xf32>
    %cst_30 = arith.constant 1.000000e-07 : f32
    %cst_31 = arith.constant 5.000000e-03 : f32
    %60 = vector.broadcast %cst_30 : f32 to vector<1x1xf32>
    %61 = arith.maximumf %60, %59 : vector<1x1xf32>
    %62 = vector.broadcast %cst_31 : f32 to vector<1x1xf32>
    %63 = arith.minimumf %62, %61 : vector<1x1xf32>
    %c0_32 = arith.constant 0 : index
    %c0_33 = arith.constant 0 : index
    %64 = vector.load %arg8[%c0_32, %c0_33] : memref<1x1xf32, #tpu.memory_space<vmem>>, vector<1x1xf32>
    tpu.vector_store %arg8[%c0_32, %c0_33], %63 {strides = array<i32>} : memref<1x1xf32, #tpu.memory_space<vmem>>, vector<1x1xf32>,
    return
  }
}

</mosaic_0001>

<llo_original>
// kernel: forward.1
$region0: #{forward.1}
  #allocation0 [shape = 'u32[]', space=smem, size = 0x4, offset = 0x4, fixed_abs, tag = 'smem constant byte address 0x4 - core index']
  #allocation1 [shape = 'u32[144,128]{1,0:T(1,128)}', space=vmem, size = 0x12000, scoped, tag = 'internal scratch']
  %s0 = inlined_call_operand.vmem [shape: f32[1,16], index: 0, kind: input, shape index: {}]
  %s1 = inlined_call_operand.vmem [shape: f32[1,16], index: 1, kind: input, shape index: {}]
  %s2 = inlined_call_operand.vmem [shape: f32[2,32], index: 2, kind: input, shape index: {}]
  %s3 = inlined_call_operand.vmem [shape: f32[2,32], index: 3, kind: input, shape index: {}]
  %s4 = inlined_call_operand.hbm [shape: f32[208,256], index: 4, kind: input, shape index: {}]
  %s5 = inlined_call_operand.hbm [shape: f32[2,32], index: 5, kind: output, shape index: {0}]
  %s6 = inlined_call_operand.hbm [shape: f32[2,32], index: 6, kind: output, shape index: {1}]
  %s7 = inlined_call_operand.vmem [shape: f32[1,16], index: 7, kind: output, shape index: {2}]
  %s8 = inlined_call_operand.hbm [shape: f32[1,1], index: 8, kind: output, shape index: {3}]
  %9 = xla_tuple %s5, %s6, %s7, %s8
  %s10 = sld [smem:[#allocation0]]
  $region58: #{forward.1} parent=0
    _
  %s12 = ssub.s32 1, %s10
  %s13 = scalar_select 0, %s12, %s10
  $region1: #{forward.1} parent=0
    #allocation2 [shape = 'u8[212992]{0}', space=vmem, size = 0x34000, scoped, tag = 'input window, operand 4, single buffered']
    #allocation3 [shape = 's32[1]{0}', space=sflag, size = 0x4, scoped, tag = 'scoped memory for forward.1']
    #allocation4 [shape = 's32[1]{0}', space=sflag, size = 0x4, scoped, tag = 'scoped memory for forward.1']
    #allocation5 [shape = 'u8[1024]{0}', space=vmem, size = 0x400, scoped, tag = 'output window, operand 0, single buffered']
    #allocation6 [shape = 'u8[1024]{0}', space=vmem, size = 0x400, scoped, tag = 'output window, operand 1, single buffered']
    #allocation7 [shape = 's32[1]{0}', space=sflag, size = 0x4, scoped, tag = 'scoped memory for forward.1']
    #allocation8 [shape = 'u8[512]{0}', space=vmem, size = 0x400, scoped, tag = 'output window, operand 3, single buffered']
    %14 = vsyncpa [#allocation3], 0
    %15 = vsyncpa [#allocation4], 0
    %16 = vsyncpa [#allocation7], 0
    // Predicated region
    $region2: #{forward.1} parent=1 // pred_check
      _
    $region3: #{forward.1} parent=1 // pred_check_branch
      %18 = sbr.rel (0) target = $region5
    $region4: #{forward.1} parent=1 // pred_region
      _
    $region5: #{forward.1} parent=1 // pred_fallthru
      _
    // Predicated region
    $region6: #{forward.1} parent=1 // pred_check
      _
    $region7: #{forward.1} parent=1 // pred_check_branch
      %20 = sbr.rel (0) target = $region9
    $region8: #{forward.1} parent=1 // pred_region
      _
    $region9: #{forward.1} parent=1 // pred_fallthru
      _
    // Predicated region
    $region10: #{forward.1} parent=1 // pred_check
      _
    $region11: #{forward.1} parent=1 // pred_check_branch
      %22 = sbr.rel (0) target = $region13
    $region12: #{forward.1} parent=1 // pred_region
      _
    $region13: #{forward.1} parent=1 // pred_fallthru
      _
    // Predicated region
    $region14: #{forward.1} parent=1 // pred_check
      _
    $region15: #{forward.1} parent=1 // pred_check_branch
      %24 = sbr.rel (0) target = $region17
    $region16: #{forward.1} parent=1 // pred_region
      _
    $region17: #{forward.1} parent=1 // pred_fallthru
      _
    // Predicated region
    $region18: #{forward.1} parent=1 // pred_check
      _
    $region19: #{forward.1} parent=1 // pred_check_branch
      %26 = sbr.rel (0) target = $region21
    $region20: #{forward.1} parent=1 // pred_region
      %s28 = ssub.s32 6656, 6656
      %29 = vsyncadd [#allocation3], %s28
      %s30 = sshll.u32 [#allocation2], 4
      %s31 = int_to_ptr.vmem [resolvable:$true] %s30
      %36 = dma.hbm_to_vmem [thread:$0]  %s4, 6656, %s31, [#allocation3], 256, 256, 16
    $region21: #{forward.1} parent=1 // pred_fallthru
      _
    // Predicated region
    $region22: #{forward.1} parent=1 // pred_check
      _
    $region23: #{forward.1} parent=1 // pred_check_branch
      %38 = sbr.rel (0) target = $region25
    $region24: #{forward.1} parent=1 // pred_region
      %39 = dma.done [#allocation3], 6656
    $region25: #{forward.1} parent=1 // pred_fallthru
      _
    %v40 = vld [vmem:[%s0] sm:$0x1]
    %v41 = vld [vmem:[%s1] sm:$0x1]
    %v42 = vld [vmem:[%s2] sm:$0x1]
    %v43 = vld [vmem:[%s2 + $0x1] sm:$0x1]
    %v44 = vld [vmem:[%s3] sm:$0x1]
    %v45 = vld [vmem:[%s3 + $0x1] sm:$0x1]
    %v47 = vlaneseq
    %v48 = vshrl.u32 %v47, 7
    %v49 = vsub.s32 0, %v48
    %v50 = vrot.slane %v41, %v49
    %51 = vrot.lane.b32.xlu0 %v50, 16
    %v52 = vpop.permute.xlu0 %51
    %55 = vrot.lane.b32.xlu0 %v42, 32
    %v56 = vpop.permute.xlu0 %55
    %59 = vrot.lane.b32.xlu0 %v43, 64
    %v60 = vpop.permute.xlu0 %59
    %vm62 = vcmask 130048
    %v63 = vsel %vm62, %v40, %v52
    %vm64 = vcmask 261120
    %v65 = vsel %vm64, %v63, %v56
    %vm66 = vcmask 523264
    %v67 = vsel %vm66, %v65, %v60
    %vm68 = vcmask 785408
    %v69 = vsel %vm68, %v67, 0.0
    %v70 = vld [vmem:[#allocation2] sm:$0xff]
    %v71 = vld [vmem:[#allocation2 + $0x8] sm:$0xff]
    %v72 = vld [vmem:[#allocation2 + $0x10] sm:$0xff]
    %v73 = vld [vmem:[#allocation2 + $0x18] sm:$0xff]
    %v74 = vld [vmem:[#allocation2 + $0x20] sm:$0xff]
    %v75 = vld [vmem:[#allocation2 + $0x28] sm:$0xff]
    %v76 = vld [vmem:[#allocation2 + $0x30] sm:$0xff]
    %v77 = vld [vmem:[#allocation2 + $0x38] sm:$0xff]
    %v78 = vld [vmem:[#allocation2 + $0x40] sm:$0xff]
    %v79 = vld [vmem:[#allocation2 + $0x48] sm:$0xff]
    %v80 = vld [vmem:[#allocation2 + $0x50] sm:$0xff]
    %v81 = vld [vmem:[#allocation2 + $0x58] sm:$0xff]
    %v82 = vld [vmem:[#allocation2 + $0x60] sm:$0xff]
    %v83 = vld [vmem:[#allocation2 + $0x68] sm:$0xff]
    %v84 = vld [vmem:[#allocation2 + $0x70] sm:$0xff]
    %v85 = vld [vmem:[#allocation2 + $0x78] sm:$0xff]
    %v86 = vld [vmem:[#allocation2 + $0x80] sm:$0xff]
    %v87 = vld [vmem:[#allocation2 + $0x88] sm:$0xff]
    %v88 = vld [vmem:[#allocation2 + $0x90] sm:$0xff]
    %v89 = vld [vmem:[#allocation2 + $0x98] sm:$0xff]
    %v90 = vld [vmem:[#allocation2 + $0xa0] sm:$0xff]
    %v91 = vld [vmem:[#allocation2 + $0xa8] sm:$0xff]
    %v92 = vld [vmem:[#allocation2 + $0xb0] sm:$0xff]
    %v93 = vld [vmem:[#allocation2 + $0xb8] sm:$0xff]
    %v94 = vld [vmem:[#allocation2 + $0xc0] sm:$0xff]
    %v95 = vld [vmem:[#allocation2 + $0xc8] sm:$0xff]
    %v96 = vld [vmem:[#allocation2 + $0xd0] sm:$0xff]
    %v97 = vld [vmem:[#allocation2 + $0xd8] sm:$0xff]
    %v98 = vld [vmem:[#allocation2 + $0xe0] sm:$0xff]
    %v99 = vld [vmem:[#allocation2 + $0xe8] sm:$0xff]
    %v100 = vld [vmem:[#allocation2 + $0xf0] sm:$0xff]
    %v101 = vld [vmem:[#allocation2 + $0xf8] sm:$0xff]
    %s102 = scalar_lea.vmem [#allocation2], 256
    %v103 = vld [vmem:[%s102] ss:$8 sm:$0x3]
    %v105 = vlaneseq
    %v106 = vshrl.u32 %v105, 7
    %v107 = vsub.s32 0, %v106
    %v108 = vrot.slane %v103, %v107
    %v109 = vlaneseq
    %v110 = vshrl.u32 %v109, 7
    %v111 = vsub.s32 1, %v110
    %v112 = vrot.slane %v103, %v111
    %115 = vmatprep.subr.mxu0 %v101
    %116 = vmatpush1.msra.mxu0 %v100
    %117 = vmatprep.subr.mxu0 %v99
    %118 = vmatpush1.msra.mxu0 %v98
    %119 = vmatprep.subr.mxu0 %v97
    %120 = vmatpush1.msra.mxu0 %v96
    %121 = vmatprep.subr.mxu0 %v95
    %122 = vmatpush1.msra.mxu0 %v94
    %123 = vmatprep.subr.mxu0 %v93
    %124 = vmatpush1.msra.mxu0 %v92
    %125 = vmatprep.subr.mxu0 %v91
    %126 = vmatpush1.msra.mxu0 %v90
    %127 = vmatprep.subr.mxu0 %v89
    %128 = vmatpush1.msra.mxu0 %v88
    %129 = vmatprep.subr.mxu0 %v87
    %130 = vmatpush1.msra.mxu0 %v86
    %131 = vmatprep.subr.mxu0 %v85
    %132 = vmatpush1.msra.mxu0 %v84
    %133 = vmatprep.subr.mxu0 %v83
    %134 = vmatpush1.msra.mxu0 %v82
    %135 = vmatprep.subr.mxu0 %v81
    %136 = vmatpush1.msra.mxu0 %v80
    %137 = vmatprep.subr.mxu0 %v79
    %138 = vmatpush1.msra.mxu0 %v78
    %139 = vmatprep.subr.mxu0 %v77
    %140 = vmatpush1.msra.mxu0 %v76
    %141 = vmatprep.subr.mxu0 %v75
    %142 = vmatpush1.msra.mxu0 %v74
    %143 = vmatprep.subr.mxu0 %v73
    %144 = vmatpush1.msra.mxu0 %v72
    %145 = vmatprep.subr.mxu0 %v71
    %146 = vmatpush1.msra.mxu0 %v70
    %147 = vmatprep.subr.mxu0 0.0
    %148 = vmatpush2.msra.mxu0 0.0
    %149 = vmatprep.subr.mxu0 0.0
    %150 = vmatpush2.msra.mxu0 0.0
    %151 = vmatprep.subr.mxu0 0.0
    %152 = vmatpush2.msra.mxu0 0.0
    %153 = vmatprep.subr.mxu0 0.0
    %154 = vmatpush2.msra.mxu0 0.0
    %155 = vmatprep.subr.mxu0 0.0
    %156 = vmatpush2.msra.mxu0 0.0
    %157 = vmatprep.subr.mxu0 0.0
    %158 = vmatpush2.msra.mxu0 0.0
    %159 = vmatprep.subr.mxu0 0.0
    %160 = vmatpush2.msra.mxu0 0.0
    %161 = vmatprep.subr.mxu0 0.0
    %162 = vmatpush2.msra.mxu0 0.0
    %163 = vmatprep.subr.mxu0 0.0
    %164 = vmatpush2.msra.mxu0 0.0
    %165 = vmatprep.subr.mxu0 0.0
    %166 = vmatpush2.msra.mxu0 0.0
    %167 = vmatprep.subr.mxu0 0.0
    %168 = vmatpush2.msra.mxu0 0.0
    %169 = vmatprep.subr.mxu0 0.0
    %170 = vmatpush2.msra.mxu0 0.0
    %171 = vmatprep.subr.mxu0 0.0
    %172 = vmatpush2.msra.mxu0 0.0
    %173 = vmatprep.subr.mxu0 0.0
    %174 = vmatpush2.msra.mxu0 0.0
    %175 = vmatprep.subr.mxu0 0.0
    %176 = vmatpush2.msra.mxu0 0.0
    %177 = vmatprep.subr.mxu0 0.0
    %178 = vmatpush2.msra.mxu0 0.0
    %179 = vmatprep.mubr.f32.mxu0 0.0
    %180 = vmatmul.mubr.f32.gmra.mxu0 %v69
    %v181 = vpop.f32.mrf.mxu0
    %v182 = vadd.f32 %v108, %v181
    %v183 = vpop.f32.mrf.mxu0
    %v184 = vadd.f32 %v112, %v183
    %185 = vdwg.mxu0
    %v186 = vxor.u32 %v182, 2147483648
    %v187 = vmul.f32 %v186, 1.442695
    %v188 = vpow.pop %v187
    %v189 = vadd.f32 %v188, 1.0
    %v190 = vrcp.pop %v189
    %v191 = vmul.f32 1.0, %v190
    %v192 = vtanh.pop %v182
    %194 = vrot.lane.b32.xlu0 %v44, 32
    %v195 = vpop.permute.xlu0 %194
    %v197 = vmul.f32 %v191, %v195
    %199 = vrot.lane.b32.xlu0 %v192, 64
    %v200 = vpop.permute.xlu0 %199
    %v202 = vmul.f32 %v191, %v200
    %204 = vrot.lane.b32.xlu0 %v202, 32
    %v205 = vpop.permute.xlu0 %204
    %v207 = vadd.f32 %v197, %v205
    %v208 = vtanh.pop %v207
    %210 = vrot.lane.b32.xlu0 %v208, 64
    %v211 = vpop.permute.xlu0 %210
    %v213 = vmul.f32 %v191, %v211
    %v214 = vld [vmem:[#allocation2 + $0x110] sm:$0xff]
    %v215 = vld [vmem:[#allocation2 + $0x120] sm:$0xff]
    %v216 = vld [vmem:[#allocation2 + $0x130] sm:$0xff]
    %v217 = vld [vmem:[#allocation2 + $0x140] sm:$0xff]
    %219 = vrot.lane.b32.xlu0 %v213, 32
    %v220 = vpop.permute.xlu0 %219
    %v221 = vsel %vm64, %v220, 0
    %223 = vmatprep.subr.mxu0 0.0
    %224 = vmatpush1.msra.mxu0 0.0
    %225 = vmatprep.subr.mxu0 0.0
    %226 = vmatpush1.msra.mxu0 0.0
    %227 = vmatprep.subr.mxu0 0.0
    %228 = vmatpush1.msra.mxu0 0.0
    %229 = vmatprep.subr.mxu0 0.0
    %230 = vmatpush1.msra.mxu0 0.0
    %231 = vmatprep.subr.mxu0 0.0
    %232 = vmatpush1.msra.mxu0 0.0
    %233 = vmatprep.subr.mxu0 0.0
    %234 = vmatpush1.msra.mxu0 0.0
    %235 = vmatprep.subr.mxu0 0.0
    %236 = vmatpush1.msra.mxu0 0.0
    %237 = vmatprep.subr.mxu0 0.0
    %238 = vmatpush1.msra.mxu0 0.0
    %239 = vmatprep.subr.mxu0 0.0
    %240 = vmatpush1.msra.mxu0 0.0
    %241 = vmatprep.subr.mxu0 0.0
    %242 = vmatpush1.msra.mxu0 0.0
    %243 = vmatprep.subr.mxu0 0.0
    %244 = vmatpush1.msra.mxu0 0.0
    %245 = vmatprep.subr.mxu0 0.0
    %246 = vmatpush1.msra.mxu0 0.0
    %247 = vmatprep.subr.mxu0 0.0
    %248 = vmatpush1.msra.mxu0 %v217
    %249 = vmatprep.subr.mxu0 0.0
    %250 = vmatpush1.msra.mxu0 %v216
    %251 = vmatprep.subr.mxu0 0.0
    %252 = vmatpush1.msra.mxu0 %v215
    %253 = vmatprep.subr.mxu0 0.0
    %254 = vmatpush1.msra.mxu0 %v214
    %255 = vmatprep.subr.mxu0 0.0
    %256 = vmatpush2.msra.mxu0 0.0
    %257 = vmatprep.subr.mxu0 0.0
    %258 = vmatpush2.msra.mxu0 0.0
    %259 = vmatprep.subr.mxu0 0.0
    %260 = vmatpush2.msra.mxu0 0.0
    %261 = vmatprep.subr.mxu0 0.0
    %262 = vmatpush2.msra.mxu0 0.0
    %263 = vmatprep.subr.mxu0 0.0
    %264 = vmatpush2.msra.mxu0 0.0
    %265 = vmatprep.subr.mxu0 0.0
    %266 = vmatpush2.msra.mxu0 0.0
    %267 = vmatprep.subr.mxu0 0.0
    %268 = vmatpush2.msra.mxu0 0.0
    %269 = vmatprep.subr.mxu0 0.0
    %270 = vmatpush2.msra.mxu0 0.0
    %271 = vmatprep.subr.mxu0 0.0
    %272 = vmatpush2.msra.mxu0 0.0
    %273 = vmatprep.subr.mxu0 0.0
    %274 = vmatpush2.msra.mxu0 0.0
    %275 = vmatprep.subr.mxu0 0.0
    %276 = vmatpush2.msra.mxu0 0.0
    %277 = vmatprep.subr.mxu0 0.0
    %278 = vmatpush2.msra.mxu0 0.0
    %279 = vmatprep.subr.mxu0 0.0
    %280 = vmatpush2.msra.mxu0 0.0
    %281 = vmatprep.subr.mxu0 0.0
    %282 = vmatpush2.msra.mxu0 0.0
    %283 = vmatprep.subr.mxu0 0.0
    %284 = vmatpush2.msra.mxu0 0.0
    %285 = vmatprep.subr.mxu0 0.0
    %286 = vmatpush2.msra.mxu0 0.0
    %287 = vmatprep.mubr.f32.mxu0 0.0
    %288 = vmatmul.mubr.f32.gmra.mxu0 %v221
    %v289 = vpop.f32.mrf.mxu0
    %v290 = vadd.f32 0.0, %v289
    %v291 = vpop.f32.mrf.mxu0
    %292 = vdwg.mxu0
    %v293 = vadd.f32 %v184, %v290
    %v294 = vxor.u32 %v293, 2147483648
    %v295 = vmul.f32 %v294, 1.442695
    %v296 = vpow.pop %v295
    %v297 = vadd.f32 %v296, 1.0
    %v298 = vrcp.pop %v297
    %v299 = vmul.f32 1.0, %v298
    %v300 = vtanh.pop %v293
    %302 = vrot.lane.b32.xlu0 %v45, 32
    %v303 = vpop.permute.xlu0 %302
    %v305 = vmul.f32 %v299, %v303
    %307 = vrot.lane.b32.xlu0 %v300, 64
    %v308 = vpop.permute.xlu0 %307
    %v310 = vmul.f32 %v299, %v308
    %312 = vrot.lane.b32.xlu0 %v310, 32
    %v313 = vpop.permute.xlu0 %312
    %v315 = vadd.f32 %v305, %v313
    %v316 = vtanh.pop %v315
    %318 = vrot.lane.b32.xlu0 %v316, 64
    %v319 = vpop.permute.xlu0 %318
    %v321 = vmul.f32 %v299, %v319
    %v322 = vld [vmem:[#allocation2 + $0x150] sm:$0xff]
    %v323 = vld [vmem:[#allocation2 + $0x160] sm:$0xff]
    %v324 = vld [vmem:[#allocation2 + $0x170] sm:$0xff]
    %v325 = vld [vmem:[#allocation2 + $0x180] sm:$0xff]
    %v326 = vld [vmem:[#allocation2 + $0x190] ss:$0 sm:$0xff]
    %328 = vrot.lane.b32.xlu0 %v321, 32
    %v329 = vpop.permute.xlu0 %328
    %v330 = vsel %vm64, %v329, 0
    %332 = vmatprep.subr.mxu0 0.0
    %333 = vmatpush1.msra.mxu0 0.0
    %334 = vmatprep.subr.mxu0 0.0
    %335 = vmatpush1.msra.mxu0 0.0
    %336 = vmatprep.subr.mxu0 0.0
    %337 = vmatpush1.msra.mxu0 0.0
    %338 = vmatprep.subr.mxu0 0.0
    %339 = vmatpush1.msra.mxu0 0.0
    %340 = vmatprep.subr.mxu0 0.0
    %341 = vmatpush1.msra.mxu0 0.0
    %342 = vmatprep.subr.mxu0 0.0
    %343 = vmatpush1.msra.mxu0 0.0
    %344 = vmatprep.subr.mxu0 0.0
    %345 = vmatpush1.msra.mxu0 0.0
    %346 = vmatprep.subr.mxu0 0.0
    %347 = vmatpush1.msra.mxu0 0.0
    %348 = vmatprep.subr.mxu0 0.0
    %349 = vmatpush1.msra.mxu0 0.0
    %350 = vmatprep.subr.mxu0 0.0
    %351 = vmatpush1.msra.mxu0 0.0
    %352 = vmatprep.subr.mxu0 0.0
    %353 = vmatpush1.msra.mxu0 0.0
    %354 = vmatprep.subr.mxu0 0.0
    %355 = vmatpush1.msra.mxu0 0.0
    %356 = vmatprep.subr.mxu0 0.0
    %357 = vmatpush1.msra.mxu0 %v325
    %358 = vmatprep.subr.mxu0 0.0
    %359 = vmatpush1.msra.mxu0 %v324
    %360 = vmatprep.subr.mxu0 0.0
    %361 = vmatpush1.msra.mxu0 %v323
    %362 = vmatprep.subr.mxu0 0.0
    %363 = vmatpush1.msra.mxu0 %v322
    %364 = vmatprep.subr.mxu0 0.0
    %365 = vmatpush2.msra.mxu0 0.0
    %366 = vmatprep.subr.mxu0 0.0
    %367 = vmatpush2.msra.mxu0 0.0
    %368 = vmatprep.subr.mxu0 0.0
    %369 = vmatpush2.msra.mxu0 0.0
    %370 = vmatprep.subr.mxu0 0.0
    %371 = vmatpush2.msra.mxu0 0.0
    %372 = vmatprep.subr.mxu0 0.0
    %373 = vmatpush2.msra.mxu0 0.0
    %374 = vmatprep.subr.mxu0 0.0
    %375 = vmatpush2.msra.mxu0 0.0
    %376 = vmatprep.subr.mxu0 0.0
    %377 = vmatpush2.msra.mxu0 0.0
    %378 = vmatprep.subr.mxu0 0.0
    %379 = vmatpush2.msra.mxu0 0.0
    %380 = vmatprep.subr.mxu0 0.0
    %381 = vmatpush2.msra.mxu0 0.0
    %382 = vmatprep.subr.mxu0 0.0
    %383 = vmatpush2.msra.mxu0 0.0
    %384 = vmatprep.subr.mxu0 0.0
    %385 = vmatpush2.msra.mxu0 0.0
    %386 = vmatprep.subr.mxu0 0.0
    %387 = vmatpush2.msra.mxu0 0.0
    %388 = vmatprep.subr.mxu0 0.0
    %389 = vmatpush2.msra.mxu0 0.0
    %390 = vmatprep.subr.mxu0 0.0
    %391 = vmatpush2.msra.mxu0 0.0
    %392 = vmatprep.subr.mxu0 0.0
    %393 = vmatpush2.msra.mxu0 0.0
    %394 = vmatprep.subr.mxu0 0.0
    %395 = vmatpush2.msra.mxu0 0.0
    %396 = vmatprep.mubr.f32.mxu0 0.0
    %397 = vmatmul.mubr.f32.gmra.mxu0 %v330
    %v398 = vpop.f32.mrf.mxu0
    %v399 = vadd.f32 %v326, %v398
    %v400 = vpop.f32.mrf.mxu0
    %401 = vdwg.mxu0
    %vm403 = vcmask 253952
    %404 = vst.msk [vmem:[#allocation5] sm:$0x1] %vm403, %v220
    %406 = vst.msk [vmem:[#allocation5 + $0x1] sm:$0x1] %vm403, %v329
    %408 = vrot.lane.b32.xlu0 %v207, 96
    %v409 = vpop.permute.xlu0 %408
    %411 = vst.msk [vmem:[#allocation6] sm:$0x1] %vm403, %v409
    %413 = vrot.lane.b32.xlu0 %v315, 96
    %v414 = vpop.permute.xlu0 %413
    %416 = vst.msk [vmem:[#allocation6 + $0x1] sm:$0x1] %vm403, %v414
    %vm417 = vcmask 122880
    %418 = vst.msk [vmem:[%s7] sm:$0x1] %vm417, %v399
    %v419 = vmax.f32 %v399, 1e-07
    %v420 = vmin.f32 %v419, 0.005
    %422 = vrot.lane.b32.xlu0 %v420, 112
    %v423 = vpop.permute.xlu0 %422
    %vm425 = vcmask 0
    %426 = vst.msk [vmem:[#allocation8] sm:$0x1] %vm425, %v423
    // Predicated region
    $region26: #{forward.1} parent=1 // pred_check
      _
    $region27: #{forward.1} parent=1 // pred_check_branch
      %428 = sbr.rel (0) target = $region29
    $region28: #{forward.1} parent=1 // pred_region
      %s430 = ssub.s32 32, 32
      %431 = vsyncadd [#allocation4], %s430
      %s433 = sshll.u32 [#allocation5], 4
      %s434 = int_to_ptr.vmem [resolvable:$true] %s433
      %436 = dma.vmem_to_hbm [thread:$0]  %s434, 32, %s5, [#allocation4]
    $region29: #{forward.1} parent=1 // pred_fallthru
      _
    // Predicated region
    $region30: #{forward.1} parent=1 // pred_check
      _
    $region31: #{forward.1} parent=1 // pred_check_branch
      %438 = sbr.rel (0) target = $region33
    $region32: #{forward.1} parent=1 // pred_region
      %s440 = ssub.s32 32, 32
      %441 = vsyncadd [#allocation7], %s440
      %s443 = sshll.u32 [#allocation6], 4
      %s444 = int_to_ptr.vmem [resolvable:$true] %s443
      %446 = dma.vmem_to_hbm [thread:$0]  %s444, 32, %s6, [#allocation7]
    $region33: #{forward.1} parent=1 // pred_fallthru
      _
    // Predicated region
    $region34: #{forward.1} parent=1 // pred_check
      _
    $region35: #{forward.1} parent=1 // pred_check_branch
      %448 = sbr.rel (0) target = $region37
    $region36: #{forward.1} parent=1 // pred_region
      _
    $region37: #{forward.1} parent=1 // pred_fallthru
      _
    // Predicated region
    $region38: #{forward.1} parent=1 // pred_check
      _
    $region39: #{forward.1} parent=1 // pred_check_branch
      %450 = sbr.rel (0) target = $region41
    $region40: #{forward.1} parent=1 // pred_region
      %s452 = ssub.s32 16, 16
      %453 = vsyncadd [#allocation7], %s452
      %s455 = sshll.u32 [#allocation8], 4
      %s456 = int_to_ptr.vmem [resolvable:$true] %s455
      %458 = dma.vmem_to_hbm [thread:$0]  %s456, 16, %s8, [#allocation7]
    $region41: #{forward.1} parent=1 // pred_fallthru
      _
    // Predicated region
    $region42: #{forward.1} parent=1 // pred_check
      _
    $region43: #{forward.1} parent=1 // pred_check_branch
      %460 = sbr.rel (0) target = $region45
    $region44: #{forward.1} parent=1 // pred_region
      %461 = dma.done [#allocation4], 32
    $region45: #{forward.1} parent=1 // pred_fallthru
      _
    // Predicated region
    $region46: #{forward.1} parent=1 // pred_check
      _
    $region47: #{forward.1} parent=1 // pred_check_branch
      %463 = sbr.rel (0) target = $region49
    $region48: #{forward.1} parent=1 // pred_region
      %464 = dma.done [#allocation7], 32
    $region49: #{forward.1} parent=1 // pred_fallthru
      _
    // Predicated region
    $region50: #{forward.1} parent=1 // pred_check
      _
    $region51: #{forward.1} parent=1 // pred_check_branch
      %466 = sbr.rel (0) target = $region53
    $region52: #{forward.1} parent=1 // pred_region
      _
    $region53: #{forward.1} parent=1 // pred_fallthru
      _
    // Predicated region
    $region54: #{forward.1} parent=1 // pred_check
      _
    $region55: #{forward.1} parent=1 // pred_check_branch
      %468 = sbr.rel (0) target = $region57
    $region56: #{forward.1} parent=1 // pred_region
      %469 = dma.done [#allocation7], 16
    $region57: #{forward.1} parent=1 // pred_fallthru
      _
    %470 = vsyncpa [#allocation3], 1
    %471 = vsyncpa [#allocation4], 1
    %472 = vsyncpa [#allocation7], 1

</llo_original>
